<compile_context>
chip_gen: v6e
topology: v6e:2x2x1
jax: 0.10.0
libtpu: 0.0.40
codegen_flags: <defaults>
</compile_context>

<pallas_src>
import jax
import jax.numpy as jnp
from jax import lax
from jax.experimental import pallas as pl
from jax.experimental.pallas import tpu as pltpu


_STATIC_UNROLL_MAX_BLOCKS = 8   # fully unroll the in-chunk lane-block loop up to here


def _gather_kernel(logp_ref, tok_ref, acc_ref):
    """Lane-resident gather of the sampled-token log-prob.

    logp_ref: (1, R, Vc)  native dtype (f32/bf16) chunk of the padded vocab
    tok_ref : (1, R, 1)   int32 sampled token ids
    acc_ref : (1, R, 128) f32 output block, revisited across the vocab axis;
              after the last chunk, row r holds the gathered log-prob in lane
              (tok[r] % 128) and zeros elsewhere.
    """
    vb = pl.program_id(1)
    _, r_rows, vc = logp_ref.shape
    n_blk = vc // 128

    @pl.when(vb == 0)
    def _init():
        acc_ref[...] = jnp.zeros_like(acc_ref)

    tok = tok_ref[0]                                          # (R, 1) int32
    lane = lax.broadcasted_iota(jnp.int32, (r_rows, 128), 1)  # lane-index constant
    # Hoist the lane-broadcast of the chunk-local token id (once per chunk).
    tok_b = jnp.broadcast_to(tok - vb * vc, (r_rows, 128))    # (R, 128) int32

    def lane_block(c, off):
        # One (R, 128) tile: load + compare + select + f32 add (VPU-only; the
        # single cross-lane reduce happens once, outside the kernel).
        xb = logp_ref[0, :, pl.ds(off, 128)]
        hit = lane == (tok_b - c * 128)
        acc_ref[0] += jnp.where(hit, xb, 0).astype(jnp.float32)

    if n_blk <= _STATIC_UNROLL_MAX_BLOCKS:
        for c in range(n_blk):
            lane_block(c, c * 128)
    else:
        @pl.loop(0, n_blk)
        def _body(c):
            lane_block(c, pl.multiple_of(c * 128, 128))


def _vmem_capacity_bytes():
    """Physical VMEM of the attached generation; conservative v7x fallback."""
    try:
        cap = getattr(pltpu.get_tpu_info(), "vmem_capacity_bytes", None)
        if cap:
            return int(cap)
    except Exception:
        pass
    return 64 << 20   # v7x per-TC VMEM (smallest of v5e/v6e/v7x)


def _choose_vocab_chunk(R, V, itemsize, vmem_cap, override=None):
    """Pick the per-step vocab chunk Vc (multiple of 128) and the padded vocab."""
    v128 = -(-V // 128) * 128
    if override is not None:
        vc = max(128, (int(override) // 128) * 128)
    else:
        # Amortize the ~0.35 us/grid-step pipeline overhead: target >= ~4 MiB of
        # logp per step (moderate lane counts, fine for v5e too).
        target_bytes = 4 << 20
        vc = max(128, (target_bytes // max(1, R * itemsize)) // 128 * 128)
    # Never exceed ~45% of physical VMEM for the two (double-buffered) logp
    # blocks: on v7x (64 MiB) this halves the chunk vs v5e/v6e (128 MiB) while
    # always keeping double-buffering alive.
    max_vc = max(128, (int(0.45 * vmem_cap) // max(1, 2 * R * itemsize)) // 128 * 128)
    vc = min(vc, max_vc, v128)
    n_chunks = -(-v128 // vc)
    vc = (-(-v128 // n_chunks) + 127) // 128 * 128     # rebalance, still mult of 128
    return vc, n_chunks, n_chunks * vc


def structure_losses_forward(logp, seq, scores, *, vocab_chunk=None):
    """StructureLosses.forward for loss_type='new_self_critical'.

    logp   : (B, T, V) log-probs, f32 or bf16 (DMA'd in native dtype)
    seq    : (B, T)    int sampled token ids (0 = pad)
    scores : (M, n)    per-sample rewards, B = M * n, seq_per_img-major batch
    Returns {'reward': (M, n) scores, 'loss': scalar} (matches the PyTorch module).
    """
    B, T, V = logp.shape
    M, n = scores.shape
    assert B == M * n, "batch must equal n_images * seq_per_img"
    assert n >= 2, "new_self_critical needs >= 2 samples per image"
    R = n * T
    itemsize = jnp.dtype(logp.dtype).itemsize

    vmem_cap = _vmem_capacity_bytes()
    Vc, nV, V_pad = _choose_vocab_chunk(R, V, itemsize, vmem_cap, vocab_chunk)

    # Pad the vocab up to nV * Vc (padded lanes are never selected by the
    # compare since all token ids are < V), then collapse (n, T) -> R rows.
    x = logp if V_pad == V else jnp.pad(logp, ((0, 0), (0, 0), (0, V_pad - V)))
    x = x.reshape(M, R, V_pad)                                 # native dtype DMA
    tok = seq.astype(jnp.int32).reshape(M, R, 1)

    # Tiny prologue math in plain JAX: shift-by-one mask and leave-one-out
    # advantage (reward minus mean reward of the OTHER samples of the image).
    sc = scores.astype(jnp.float32)
    mask = (seq > 0).astype(jnp.float32)
    mask = jnp.concatenate([jnp.ones((B, 1), jnp.float32), mask[:, :-1]], axis=1)
    baseline = (jnp.sum(sc, axis=1, keepdims=True) - sc) / jnp.float32(n - 1)
    adv = sc - baseline                                        # (M, n)
    w = (mask.reshape(M, n, T) * adv[:, :, None]).reshape(M, R)

    # Explicit VMEM budget: double-buffered logp chunk + small blocks + margin.
    r8 = -(-R // 8) * 8
    need = 2 * R * Vc * itemsize + 4 * r8 * 128 * 4 + (2 << 20)
    vmem_limit = int(min(max(need, 16 << 20), int(0.9 * vmem_cap)))

    grid_spec = pltpu.PrefetchScalarGridSpec(
        num_scalar_prefetch=0,
        grid=(M, nV),                       # image (parallel) x vocab chunk (arbitrary)
        in_specs=[
            pl.BlockSpec((1, R, Vc), lambda i, vb: (i, 0, vb)),
            pl.BlockSpec((1, R, 1), lambda i, vb: (i, 0, 0)),
        ],
        out_specs=pl.BlockSpec((1, R, 128), lambda i, vb: (i, 0, 0)),
    )

    acc = pl.pallas_call(
        _gather_kernel,
        grid_spec=grid_spec,
        out_shape=jax.ShapeDtypeStruct((M, R, 128), jnp.float32),
        compiler_params=pltpu.CompilerParams(
            dimension_semantics=("parallel", "arbitrary"),
            vmem_limit_bytes=vmem_limit),
        cost_estimate=pl.CostEstimate(
            flops=3 * M * R * V_pad,
            transcendentals=0,
            bytes_accessed=M * R * V_pad * itemsize + M * R * 4 + M * R * 128 * 4),
    )(x, tok)

    # Tiny epilogue: the single cross-lane reduce of the lane-resident gather,
    # then the weighted sum / mask normalisation (matches the PyTorch formula).
    lp = jnp.sum(acc, axis=-1)                                 # (M, R) f32
    loss = jnp.sum(-(lp * w)) / jnp.sum(mask)
    # PyTorch returns scores cast to input dtype (type_as); keep them in f32 to
    # avoid bf16 truncation of the reward values (cosmetic, loss unaffected).
    return {"reward": sc, "loss": loss}


def _reference(logp, seq, scores):
    """Plain-JAX transcription of the PyTorch forward (new_self_critical)."""
    B, T, V = logp.shape
    M, n = scores.shape
    mask = (seq > 0).astype(jnp.float32)
    mask = jnp.concatenate([jnp.ones((B, 1), jnp.float32), mask[:, :-1]], axis=1)
    lp = jnp.take_along_axis(logp.astype(jnp.float32),
                             seq[:, :, None].astype(jnp.int32), axis=2)[:, :, 0]
    baseline = (scores.sum(1, keepdims=True) - scores) / (n - 1)
    adv = (scores - baseline).reshape(-1, 1)
    return jnp.sum(-lp * mask * adv) / jnp.sum(mask)


if __name__ == "__main__":
    key = jax.random.PRNGKey(0)

    def make_inputs(k, M, n, T, V, dtype):
        k1, k2, k3, k4 = jax.random.split(k, 4)
        B = M * n
        logits = jax.random.normal(k1, (B, T, V), dtype=jnp.float32)
        lp = jax.nn.log_softmax(logits, axis=-1).astype(dtype)
        sq = jax.random.randint(k2, (B, T), 0, V, dtype=jnp.int32)
        sq = jnp.where(jax.random.uniform(k3, (B, T)) < 0.25, 0, sq)   # pads -> mask path
        sc = jax.random.normal(k4, (M, n), dtype=jnp.float32)          # synthetic CIDEr
        return lp, sq, sc

    cases = [
        # (M, n, T, V, dtype, vocab_chunk, tol)
        (2, 4, 8, 512, jnp.float32, 128, 1e-5),      # 4 vocab chunks, static lane loop
        (2, 4, 8, 500, jnp.float32, None, 1e-5),     # V % 128 != 0 -> padded vocab
        (2, 4, 8, 4096, jnp.bfloat16, 2048, 1e-3),   # bf16, 2 chunks, pl.loop lane path
    ]
    for idx, (M, n, T, V, dtype, vchunk, tol) in enumerate(cases):
        key, sub = jax.random.split(key)
        logp, seq, scores = make_inputs(sub, M, n, T, V, dtype)
        out = structure_losses_forward(logp, seq, scores, vocab_chunk=vchunk)
        loss = jax.block_until_ready(out["loss"])
        ref = _reference(logp, seq, scores)
        assert out["reward"].shape == (M, n)
        assert jnp.allclose(loss, ref, rtol=tol, atol=tol), (idx, loss, ref)

    print("KERNEL_OK")
</pallas_src>

<mosaic_0001>
module attributes {stable_mosaic.version = 11 : i64} {
  func.func @_gather_kernel(%arg0: i32, %arg1: i32, %arg2: memref<1x32x128xf32, #tpu.memory_space<vmem>>, %arg3: memref<1x32x1xi32, #tpu.memory_space<vmem>>, %arg4: memref<1x32x128xf32, #tpu.memory_space<vmem>>) attributes {dimension_semantics = [#tpu.dimension_semantics<parallel>, #tpu.dimension_semantics<arbitrary>], iteration_bounds = array<i64: 2, 4>, scalar_prefetch = 0 : i64, scratch_operands = 0 : i64, tpu.core_type = #tpu.core_type<tc>, window_params = [{transform_indices = @transform_0, window_bounds = array<i64: 1, 32, 128>}, {transform_indices = @transform_1, window_bounds = array<i64: 1, 32, 1>}, {transform_indices = @transform_2, window_bounds = array<i64: 1, 32, 128>}]} {
    %c0_i32 = arith.constant 0 : i32
    %0 = arith.cmpi eq, %arg1, %c0_i32 : i32
    %1 = arith.extui %0 : i1 to i32
    %c0_i32_0 = arith.constant 0 : i32
    %2 = arith.cmpi ne, %1, %c0_i32_0 : i32
    scf.if %2 {
      %cst = arith.constant 0.000000e+00 : f32
      %25 = vector.broadcast %cst : f32 to vector<1x32x128xf32>
      %c0_14 = arith.constant 0 : index
      %c0_15 = arith.constant 0 : index
      %c0_16 = arith.constant 0 : index
      %26 = vector.load %arg4[%c0_14, %c0_15, %c0_16] : memref<1x32x128xf32, #tpu.memory_space<vmem>>, vector<1x32x128xf32>
      tpu.vector_store %arg4[%c0_14, %c0_15, %c0_16], %25 {strides = array<i32>} : memref<1x32x128xf32, #tpu.memory_space<vmem>>, vector<1x32x128xf32>,
    } else {
    }
    %c0 = arith.constant 0 : index
    %c0_1 = arith.constant 0 : index
    %c0_2 = arith.constant 0 : index
    %3 = vector.load %arg3[%c0, %c0_1, %c0_2] : memref<1x32x1xi32, #tpu.memory_space<vmem>>, vector<1x32x1xi32>
    %4 = vector.shape_cast %3 : vector<1x32x1xi32> to vector<32x1xi32>
    %5 = tpu.iota {dimensions = array<i32: 1>} : vector<32x128xi32>
    %c128_i32 = arith.constant 128 : i32
    %6 = arith.muli %arg1, %c128_i32 : i32
    %7 = vector.broadcast %6 : i32 to vector<32x1xi32>
    %8 = arith.subi %4, %7 : vector<32x1xi32>
    %9 = vector.shape_cast %8 : vector<32x1xi32> to vector<32x1xi32>
    %10 = vector.broadcast %9 : vector<32x1xi32> to vector<32x128xi32>
    %c0_3 = arith.constant 0 : index
    %c0_4 = arith.constant 0 : index
    %c0_5 = arith.constant 0 : index
    %11 = vector.load %arg2[%c0_3, %c0_4, %c0_5] : memref<1x32x128xf32, #tpu.memory_space<vmem>>, vector<1x32x128xf32>
    %12 = vector.shape_cast %11 : vector<1x32x128xf32> to vector<32x128xf32>
    %c0_i32_6 = arith.constant 0 : i32
    %13 = vector.broadcast %c0_i32_6 : i32 to vector<32x128xi32>
    %14 = arith.subi %10, %13 : vector<32x128xi32>
    %15 = arith.cmpi eq, %5, %14 : vector<32x128xi32>
    %c0_7 = arith.constant 0 : index
    %c0_8 = arith.constant 0 : index
    %c0_9 = arith.constant 0 : index
    %16 = vector.load %arg4[%c0_7, %c0_8, %c0_9] : memref<1x32x128xf32, #tpu.memory_space<vmem>>, vector<1x32x128xf32>
    %17 = vector.shape_cast %16 : vector<1x32x128xf32> to vector<32x128xf32>
    %c0_i32_10 = arith.constant 0 : i32
    %18 = arith.sitofp %c0_i32_10 : i32 to f32
    %19 = vector.broadcast %18 : f32 to vector<32x128xf32>
    %20 = arith.select %15, %12, %19 : vector<32x128xi1>, vector<32x128xf32>
    %21 = arith.addf %17, %20 : vector<32x128xf32>
    %c0_11 = arith.constant 0 : index
    %c0_12 = arith.constant 0 : index
    %c0_13 = arith.constant 0 : index
    %22 = vector.load %arg4[%c0_11, %c0_12, %c0_13] : memref<1x32x128xf32, #tpu.memory_space<vmem>>, vector<1x32x128xf32>
    %23 = vector.shape_cast %22 : vector<1x32x128xf32> to vector<32x128xf32>
    %24 = vector.shape_cast %21 : vector<32x128xf32> to vector<1x32x128xf32>
    tpu.vector_store %arg4[%c0_11, %c0_12, %c0_13], %24 {strides = array<i32>} : memref<1x32x128xf32, #tpu.memory_space<vmem>>, vector<1x32x128xf32>,
    return
  }
  func.func @transform_0(%arg0: i32, %arg1: i32) -> (i32, i32, i32) {
    %c0_i32 = arith.constant 0 : i32
    %c0_i32_0 = arith.constant 0 : i32
    return %arg0, %c0_i32, %arg1 : i32, i32, i32
  }
  func.func @transform_1(%arg0: i32, %arg1: i32) -> (i32, i32, i32) {
    %c0_i32 = arith.constant 0 : i32
    %c0_i32_0 = arith.constant 0 : i32
    %c0_i32_1 = arith.constant 0 : i32
    return %arg0, %c0_i32, %c0_i32_0 : i32, i32, i32
  }
  func.func @transform_2(%arg0: i32, %arg1: i32) -> (i32, i32, i32) {
    %c0_i32 = arith.constant 0 : i32
    %c0_i32_0 = arith.constant 0 : i32
    %c0_i32_1 = arith.constant 0 : i32
    return %arg0, %c0_i32, %c0_i32_0 : i32, i32, i32
  }
}

</mosaic_0001>

<llo_original>
// kernel: tpu_custom_call.1
$region0: #{tpu_custom_call.1}
  #allocation0 [shape = 'u32[]', space=smem, size = 0x4, offset = 0x4, fixed_abs, tag = 'smem constant byte address 0x4 - core index']
  #allocation1 [shape = 'u32[144,128]{1,0:T(1,128)}', space=vmem, size = 0x12000, scoped, tag = 'internal scratch']
  %s0 = inlined_call_operand.hbm [shape: f32[2,32,512], index: 0, kind: input, shape index: {}]
  %s1 = inlined_call_operand.vmem [shape: s32[2,32,1], index: 1, kind: input, shape index: {}]
  %s2 = inlined_call_operand.hbm [shape: f32[2,32,128], index: 2, kind: output, shape index: {}]
  %s3 = sld [smem:[#allocation0]]
  $region49: #{tpu_custom_call.1} parent=0
    _
  %s5 = ssub.s32 1, %s3
  %s6 = scalar_select 0, %s5, %s3
  $region1: #{tpu_custom_call.1} parent=0
    #allocation2 [shape = 'u8[32768]{0}', space=vmem, size = 0x8000, scoped, tag = 'input window, operand 0']
    #allocation3 [shape = 's32[2]{0}', space=sflag, size = 0x8, scoped, tag = 'scoped memory for tpu_custom_call.1']
    #allocation4 [shape = 's32[2]{0}', space=sflag, size = 0x8, scoped, tag = 'scoped memory for tpu_custom_call.1']
    #allocation5 [shape = 'u8[32768]{0}', space=vmem, size = 0x8000, scoped, tag = 'output window, operand 0']
    %7 = vsyncpa [#allocation3], 0
    %s8 = scalar_lea.sflag [#allocation3], 1
    %9 = vsyncpa %s8, 0
    %10 = vsyncpa [#allocation4], 0
    %s11 = scalar_lea.sflag [#allocation4], 1
    %12 = vsyncpa %s11, 0
    loop: start=0, step=1, limit=10
    $region2: #{tpu_custom_call.1} parent=1 // loop_pre_header
      _
    $region3: #{tpu_custom_call.1} parent=1 // loop_header
      %s14 = sphi 0, %s18
      %p15 = scmp.ge.s32.totalorder %s14, 10
      %s21 = sphi 0, %s33
      %s22 = sphi 0, %s29
      %s23 = sphi 0, %s21
      %s24 = sphi 0, %s22
      %s25 = sphi 0, %s23
      %s26 = sphi 0, %s24
      %s38 = sphi 0, %s40
      %s41 = sphi 0, %s38
      %s42 = sphi 0, %s41
      %s58 = sphi 0, %s42
      %s64 = sphi 0, %s66
      %s67 = sphi 0, %s64
      %s68 = sphi 0, %s67
      %s84 = sphi 0, %s68
      %s90 = sphi 0, %s92
      %s93 = sphi 0, %s90
      %s94 = sphi 0, %s93
      %s110 = sphi 0, %s94
    $region4: #{tpu_custom_call.1} parent=1 // loop_header_branch
      %17 = sbr.rel (%p15) target = $region8
    $region5: #{tpu_custom_call.1} parent=1 // loop_body
      %s19 = ssub.s32 %s14, 1
      %s20 = ssub.s32 %s14, 2
      %s27 = sadd.s32 1, %s22
      %p28 = scmp.ge.s32.totalorder %s27, 4
      %s29 = scalar_select %p28, 0, %s27
      %s30 = sadd.s32 1, %s21
      %s31 = scalar_select %p28, %s30, %s21
      %p32 = scmp.ge.s32.totalorder %s31, 2
      %s33 = scalar_select %p32, 0, %s31
      %s34 = ssub.s32 %s21, %s33
      %s35 = ssub.s32 %s22, %s29
      %s36 = sor.u32 %s34, %s35
      %p37 = scmp.eq.s32.totalorder %s36, 0
      %s39 = sadd.s32 %s38, 1
      %s40 = scalar_select %p37, %s38, %s39
      %p43 = pneg %p37
      %p44 = scmp.eq.s32.totalorder %s14, 7
      %p45 = por %p43, %p44
      %p46 = scmp.ne.s32.totalorder %s38, %s41
      %p47 = scmp.eq.s32.totalorder %s14, 0
      %p48 = por %p46, %p47
      %p49 = scmp.ne.s32.totalorder %s38, %s41
      %p50 = scmp.eq.s32.totalorder %s19, 7
      %p51 = por %p49, %p50
      %p52 = scmp.ne.s32.totalorder %s41, %s42
      %p53 = scmp.eq.s32.totalorder %s19, 0
      %p54 = por %p52, %p53
      %p55 = scmp.ne.s32.totalorder %s41, %s42
      %p56 = scmp.eq.s32.totalorder %s20, 7
      %p57 = por %p55, %p56
      %p59 = scmp.ne.s32.totalorder %s42, %s58
      %p60 = scmp.eq.s32.totalorder %s20, 0
      %p61 = por %p59, %p60
      %s62 = ssub.s32 %s21, %s33
      %p63 = scmp.eq.s32.totalorder %s62, 0
      %s65 = sadd.s32 %s64, 1
      %s66 = scalar_select %p63, %s64, %s65
      %p69 = pneg %p63
      %p70 = scmp.eq.s32.totalorder %s14, 7
      %p71 = por %p69, %p70
      %p72 = scmp.ne.s32.totalorder %s64, %s67
      %p73 = scmp.eq.s32.totalorder %s14, 0
      %p74 = por %p72, %p73
      %p75 = scmp.ne.s32.totalorder %s64, %s67
      %p76 = scmp.eq.s32.totalorder %s19, 7
      %p77 = por %p75, %p76
      %p78 = scmp.ne.s32.totalorder %s67, %s68
      %p79 = scmp.eq.s32.totalorder %s19, 0
      %p80 = por %p78, %p79
      %p81 = scmp.ne.s32.totalorder %s67, %s68
      %p82 = scmp.eq.s32.totalorder %s20, 7
      %p83 = por %p81, %p82
      %p85 = scmp.ne.s32.totalorder %s68, %s84
      %p86 = scmp.eq.s32.totalorder %s20, 0
      %p87 = por %p85, %p86
      %s88 = ssub.s32 %s21, %s33
      %p89 = scmp.eq.s32.totalorder %s88, 0
      %s91 = sadd.s32 %s90, 1
      %s92 = scalar_select %p89, %s90, %s91
      %p95 = pneg %p89
      %p96 = scmp.eq.s32.totalorder %s14, 7
      %p97 = por %p95, %p96
      %p98 = scmp.ne.s32.totalorder %s90, %s93
      %p99 = scmp.eq.s32.totalorder %s14, 0
      %p100 = por %p98, %p99
      %p101 = scmp.ne.s32.totalorder %s90, %s93
      %p102 = scmp.eq.s32.totalorder %s19, 7
      %p103 = por %p101, %p102
      %p104 = scmp.ne.s32.totalorder %s93, %s94
      %p105 = scmp.eq.s32.totalorder %s19, 0
      %p106 = por %p104, %p105
      %p107 = scmp.ne.s32.totalorder %s93, %s94
      %p108 = scmp.eq.s32.totalorder %s20, 7
      %p109 = por %p107, %p108
      %p111 = scmp.ne.s32.totalorder %s94, %s110
      %p112 = scmp.eq.s32.totalorder %s20, 0
      %p113 = por %p111, %p112
      %p114 = scmp.le.s32.totalorder 1, %s14
      %p115 = scmp.lt.s32.totalorder %s14, 9
      %p116 = pnand %p114, %p115
      %p117 = pneg %p116
      // Predicated region
      $region9: #{tpu_custom_call.1} parent=5 // pred_check
        _
      $region10: #{tpu_custom_call.1} parent=5 // pred_check_branch
        %119 = sbr.rel (%p116) target = $region12
      $region11: #{tpu_custom_call.1} parent=5 // pred_region
        %s120 = ssub.s32 %s14, 1
      $region12: #{tpu_custom_call.1} parent=5 // pred_fallthru
        _
      %p121 = scmp.lt.s32.totalorder %s14, 8
      // Predicated region
      $region13: #{tpu_custom_call.1} parent=5 // pred_check
        %p122 = pneg %p121
      $region14: #{tpu_custom_call.1} parent=5 // pred_check_branch
        %124 = sbr.rel (%p122) target = $region16
      $region15: #{tpu_custom_call.1} parent=5 // pred_region
        // Predicated region
        $region17: #{tpu_custom_call.1} parent=15 // pred_check
          %p125 = pneg %p48
        $region18: #{tpu_custom_call.1} parent=15 // pred_check_branch
          %127 = sbr.rel (%p125) target = $region20
        $region19: #{tpu_custom_call.1} parent=15 // pred_region
          %s128 = sand.u32 %s38, 1
          %s129 = scalar_lea.sflag [#allocation3], %s128
          %s130 = sand.u32 %s38, 1
          %s131 = smul.addr %s130, 32
          %s132 = scalar_lea.vmem [#allocation2], %s131
          %s134 = ssub.s32 512, 512
          %135 = vsyncadd %s129, %s134
          %s136 = smul.addr %s21, 16
          %s137 = sadd.s32 %s22, %s136
          %s138 = smul.addr %s137, 128
          %s139 = scalar_lea.hbm %s0, %s138
          %s140 = sshll.u32 %s132, 4
          %s141 = int_to_ptr.vmem [resolvable:$true] %s140
          %146 = dma.hbm_to_vmem [thread:$0]  %s139, 512, %s141, %s129, 512, 128, 8
        $region20: #{tpu_custom_call.1} parent=15 // pred_fallthru
          _
        // Predicated region
        $region21: #{tpu_custom_call.1} parent=15 // pred_check
          %p147 = pneg %p74
        $region22: #{tpu_custom_call.1} parent=15 // pred_check_branch
          %149 = sbr.rel (%p147) target = $region24
        $region23: #{tpu_custom_call.1} parent=15 // pred_region
          %p150 = scmp.lt.s32.totalorder %s21, 1
          %s151 = scalar_select %p150, %s21, 1
          %s152 = smul.addr %s151, 4
          %s153 = smul.addr %s152, 8
          %s154 = scalar_lea.vmem %s1, %s153
        $region24: #{tpu_custom_call.1} parent=15 // pred_fallthru
          _
      $region16: #{tpu_custom_call.1} parent=5 // pred_fallthru
        _
      %p155 = scmp.le.s32.totalorder 1, %s14
      %p156 = scmp.lt.s32.totalorder %s14, 9
      %p157 = pnand %p155, %p156
      %p158 = pneg %p157
      // Predicated region
      $region25: #{tpu_custom_call.1} parent=5 // pred_check
        _
      $region26: #{tpu_custom_call.1} parent=5 // pred_check_branch
        %160 = sbr.rel (%p157) target = $region28
      $region27: #{tpu_custom_call.1} parent=5 // pred_region
        %s161 = ssub.s32 %s14, 1
        %s162 = sand.u32 %s41, 1
        %s163 = scalar_lea.sflag [#allocation3], %s162
        %s164 = sand.u32 %s41, 1
        %s165 = smul.addr %s164, 32
        %s166 = scalar_lea.vmem [#allocation2], %s165
        // Predicated region
        $region29: #{tpu_custom_call.1} parent=27 // pred_check
          %p167 = pneg %p54
        $region30: #{tpu_custom_call.1} parent=27 // pred_check_branch
          %169 = sbr.rel (%p167) target = $region32
        $region31: #{tpu_custom_call.1} parent=27 // pred_region
          %170 = dma.done %s163, 512
        $region32: #{tpu_custom_call.1} parent=27 // pred_fallthru
          _
        %s171 = sand.u32 %s41, 1
        %s172 = scalar_lea.sflag [#allocation3], %s171
        %s173 = sand.u32 %s41, 1
        %s174 = smul.addr %s173, 32
        %s175 = scalar_lea.vmem [#allocation2], %s174
        %p176 = pneg %p54
        %p177 = pneg %p51
        %p178 = scmp.lt.s32.totalorder %s23, 1
        %s179 = scalar_select %p178, %s23, 1
        %s180 = smul.addr %s179, 4
        %s181 = smul.addr %s180, 8
        %s182 = scalar_lea.vmem %s1, %s181
        %p183 = pneg %p80
        %p184 = pneg %p77
        %p185 = pneg %p106
        %p186 = pneg %p103
        %s187 = sand.u32 %s93, 1
        %s188 = scalar_lea.sflag [#allocation4], %s187
        %s189 = sand.u32 %s93, 1
        %s190 = smul.addr %s189, 32
        %s191 = scalar_lea.vmem [#allocation5], %s190
        %p192 = scmp.lt.s32.totalorder %s23, 1
        %s193 = scalar_select %p192, %s23, 1
        %s194 = smul.addr %s193, 4
        %s195 = smul.addr %s194, 8
        %s196 = scalar_lea.vmem %s1, %s195
        %p197 = scmp.eq.s32.totalorder %s24, 0
        // Predicated region
        $region33: #{tpu_custom_call.1} parent=27 // pred_check
          %p198 = pneg %p197
        $region34: #{tpu_custom_call.1} parent=27 // pred_check_branch
          %200 = sbr.rel (%p198) target = $region36
        $region35: #{tpu_custom_call.1} parent=27 // pred_region
          %201 = vst [vmem:[%s191] sm:$0xff] 0.0
          %202 = vst [vmem:[%s191 + $0x8] sm:$0xff] 0.0
          %203 = vst [vmem:[%s191 + $0x10] sm:$0xff] 0.0
          %204 = vst [vmem:[%s191 + $0x18] sm:$0xff] 0.0
        $region36: #{tpu_custom_call.1} parent=27 // pred_fallthru
          _
        %v205 = vld [vmem:[%s196] sm:$0xff]
        %v206 = vld [vmem:[%s196 + $0x8] sm:$0xff]
        %v207 = vld [vmem:[%s196 + $0x10] sm:$0xff]
        %v208 = vld [vmem:[%s196 + $0x18] sm:$0xff]
        %v209 = vlaneseq
        %v210 = vand.u32 %v209, 127
        %s211 = smul.u32 %s24, 128
        %v212 = vstv %s211
        %v213 = vsub.s32 %v205, %v212
        %v214 = vsub.s32 %v206, %v212
        %v215 = vsub.s32 %v207, %v212
        %v216 = vsub.s32 %v208, %v212
        %217 = vset.pattern.permute.xlu0 0
        %218 = vperm.xlu0 %217, %v213
        %v219 = vpop.permute.xlu0 %218
        %220 = vset.pattern.permute.xlu0 0
        %221 = vperm.xlu0 %220, %v214
        %v222 = vpop.permute.xlu0 %221
        %223 = vset.pattern.permute.xlu0 0
        %224 = vperm.xlu0 %223, %v215
        %v225 = vpop.permute.xlu0 %224
        %226 = vset.pattern.permute.xlu0 0
        %227 = vperm.xlu0 %226, %v216
        %v228 = vpop.permute.xlu0 %227
        %v229 = vld [vmem:[%s166] sm:$0xff]
        %v230 = vld [vmem:[%s166 + $0x8] sm:$0xff]
        %v231 = vld [vmem:[%s166 + $0x10] sm:$0xff]
        %v232 = vld [vmem:[%s166 + $0x18] sm:$0xff]
        %vm233 = vcmp.eq.s32.totalorder %v210, %v219
        %vm234 = vcmp.eq.s32.totalorder %v210, %v222
        %vm235 = vcmp.eq.s32.totalorder %v210, %v225
        %vm236 = vcmp.eq.s32.totalorder %v210, %v228
        %v237 = vld [vmem:[%s191] sm:$0xff]
        %v238 = vld [vmem:[%s191 + $0x8] sm:$0xff]
        %v239 = vld [vmem:[%s191 + $0x10] sm:$0xff]
        %v240 = vld [vmem:[%s191 + $0x18] sm:$0xff]
        %v241 = vsel %vm233, %v229, 0.0
        %v242 = vsel %vm234, %v230, 0.0
        %v243 = vsel %vm235, %v231, 0.0
        %v244 = vsel %vm236, %v232, 0.0
        %v245 = vadd.f32 %v237, %v241
        %v246 = vadd.f32 %v238, %v242
        %v247 = vadd.f32 %v239, %v243
        %v248 = vadd.f32 %v240, %v244
        %249 = vst [vmem:[%s191] sm:$0xff] %v245
        %250 = vst [vmem:[%s191 + $0x8] sm:$0xff] %v246
        %251 = vst [vmem:[%s191 + $0x10] sm:$0xff] %v247
        %252 = vst [vmem:[%s191 + $0x18] sm:$0xff] %v248
        %s253 = sand.u32 %s93, 1
        %s254 = scalar_lea.sflag [#allocation4], %s253
        %s255 = sand.u32 %s93, 1
        %s256 = smul.addr %s255, 32
        %s257 = scalar_lea.vmem [#allocation5], %s256
        // Predicated region
        $region37: #{tpu_custom_call.1} parent=27 // pred_check
          %p258 = pneg %p103
        $region38: #{tpu_custom_call.1} parent=27 // pred_check_branch
          %260 = sbr.rel (%p258) target = $region40
        $region39: #{tpu_custom_call.1} parent=27 // pred_region
          %s262 = ssub.s32 512, 512
          %263 = vsyncadd %s254, %s262
          %s264 = smul.addr %s23, 4
          %s265 = smul.addr %s264, 128
          %s266 = scalar_lea.hbm %s2, %s265
          %s267 = sshll.u32 %s257, 4
          %s268 = int_to_ptr.vmem [resolvable:$true] %s267
          %273 = dma.vmem_to_hbm [thread:$0]  %s268, 512, %s266, %s254, 128, 128, 8
        $region40: #{tpu_custom_call.1} parent=27 // pred_fallthru
          _
      $region28: #{tpu_custom_call.1} parent=5 // pred_fallthru
        _
      %p274 = scmp.le.s32.totalorder 2, %s14
      // Predicated region
      $region41: #{tpu_custom_call.1} parent=5 // pred_check
        %p275 = pneg %p274
      $region42: #{tpu_custom_call.1} parent=5 // pred_check_branch
        %277 = sbr.rel (%p275) target = $region44
      $region43: #{tpu_custom_call.1} parent=5 // pred_region
        %s278 = ssub.s32 %s14, 2
        // Predicated region
        $region45: #{tpu_custom_call.1} parent=43 // pred_check
          %p279 = pneg %p109
        $region46: #{tpu_custom_call.1} parent=43 // pred_check_branch
          %281 = sbr.rel (%p279) target = $region48
        $region47: #{tpu_custom_call.1} parent=43 // pred_region
          %s282 = sand.u32 %s94, 1
          %s283 = scalar_lea.sflag [#allocation4], %s282
          %s284 = sand.u32 %s94, 1
          %s285 = smul.addr %s284, 32
          %s286 = scalar_lea.vmem [#allocation5], %s285
          %287 = dma.done %s283, 512
        $region48: #{tpu_custom_call.1} parent=43 // pred_fallthru
          _
      $region44: #{tpu_custom_call.1} parent=5 // pred_fallthru
        _
    $region6: #{tpu_custom_call.1} parent=1 // loop_footer
      %s18 = sadd.s32 1, %s14
    $region7: #{tpu_custom_call.1} parent=1 // loop_footer_branch
      %13 = sbr.rel target = $region3
    $region8: #{tpu_custom_call.1} parent=1 // loop_exit
      _
    %288 = vsyncpa [#allocation3], 1
    %s289 = scalar_lea.sflag [#allocation3], 1
    %290 = vsyncpa %s289, 1
    %291 = vsyncpa [#allocation4], 1
    %s292 = scalar_lea.sflag [#allocation4], 1
    %293 = vsyncpa %s292, 1

</llo_original>
